<compile_context>
chip_gen: v6e
topology: v6e:2x2x1
jax: 0.10.0
libtpu: 0.0.40
codegen_flags: <defaults>
</compile_context>

<pallas_src>
import jax
import jax.numpy as jnp
from jax.experimental import pallas as pl
from jax.experimental.pallas import tpu as pltpu


def _vad_proj_kernel(vad_ref, wt_ref, out_ref):
    """out[b, n] = sum_k vad[b, k] * W_T[k, n]; K is tiny and fully unrolled on the VPU."""
    vad = vad_ref[...]   # (Bblk, K)
    wt = wt_ref[...]     # (K, N)
    k_dim = vad.shape[1]
    acc = vad[:, 0:1].astype(jnp.float32) * wt[0:1, :].astype(jnp.float32)
    for k in range(1, k_dim):  # K is a trace-time constant (e.g. 3) -> unrolled
        acc = acc + (vad[:, k:k + 1].astype(jnp.float32)
                     * wt[k:k + 1, :].astype(jnp.float32))
    out_ref[...] = acc.astype(out_ref.dtype)


def prepare_vad_projection(W: jax.Array) -> jax.Array:
    """One-time (module-init) transpose of the PyTorch-layout parameter.

    W: (output_dim, input_dim)  ->  W_T: (input_dim, output_dim)
    """
    return jnp.asarray(W).T


def vad_projection_forward(vad: jax.Array, W_T: jax.Array, *, row_tile: int = 512) -> jax.Array:
    """Pallas equivalent of `torch.matmul(vad, W.T)`.

    vad: (..., input_dim)
    W_T: (input_dim, output_dim)   -- pre-transposed parameter (see prepare_vad_projection)
    returns (..., output_dim)
    """
    *lead, K = vad.shape
    K2, N = W_T.shape
    assert K == K2, "vad last dim must match the projection's input_dim"

    vad2d = vad.reshape(-1, K)
    B = vad2d.shape[0]

    cost = pl.CostEstimate(
        flops=2 * B * K * N,
        transcendentals=0,
        bytes_accessed=4 * (B * K + K * N + B * N),
    )

    if B <= row_tile:
        # Single program: whole problem lives in VMEM, no grid / pipeline overhead.
        out = pl.pallas_call(
            _vad_proj_kernel,
            out_shape=jax.ShapeDtypeStruct((B, N), vad.dtype),
            in_specs=[
                pl.BlockSpec(memory_space=pltpu.MemorySpace.VMEM),
                pl.BlockSpec(memory_space=pltpu.MemorySpace.VMEM),
            ],
            out_specs=pl.BlockSpec(memory_space=pltpu.MemorySpace.VMEM),
            cost_estimate=cost,
        )(vad2d, W_T)
    else:
        # Large flattened batch: tile over rows; N (multiple of 128 for 768) stays
        # un-tiled so output stores are lane-dense and unmasked.
        grid = (pl.cdiv(B, row_tile),)
        out = pl.pallas_call(
            _vad_proj_kernel,
            out_shape=jax.ShapeDtypeStruct((B, N), vad.dtype),
            grid_spec=pltpu.PrefetchScalarGridSpec(
                num_scalar_prefetch=0,
                grid=grid,
                in_specs=[
                    pl.BlockSpec((row_tile, K), lambda i: (i, 0)),
                    pl.BlockSpec((K, N), lambda i: (0, 0)),
                ],
                out_specs=pl.BlockSpec((row_tile, N), lambda i: (i, 0)),
            ),
            compiler_params=pltpu.CompilerParams(
                dimension_semantics=("parallel",),
            ),
            cost_estimate=cost,
        )(vad2d, W_T)

    return out.reshape(*lead, N)


if __name__ == "__main__":
    input_dim = 3
    output_dim = 768

    key = jax.random.PRNGKey(0)
    k_w, k_x1, k_x2 = jax.random.split(key, 3)

    # Deterministic synthetic parameter (the real module torch.load()s it).
    W = jax.random.normal(k_w, (output_dim, input_dim), dtype=jnp.float32)
    W_T = prepare_vad_projection(W)  # one-time transpose at "init"

    # Small case with leading batch dims (2, 4) of VAD frames in [-1, 1]:
    # exercises the single-program (no-grid) path + leading-dim flattening.
    vad_small = jax.random.uniform(k_x1, (2, 4, input_dim), dtype=jnp.float32,
                                   minval=-1.0, maxval=1.0)
    out_small = jax.block_until_ready(vad_projection_forward(vad_small, W_T))
    ref_small = jnp.einsum("...k,nk->...n", vad_small, W)
    assert out_small.shape == (2, 4, output_dim)
    assert jnp.allclose(out_small, ref_small, atol=1e-5, rtol=1e-5)

    # Larger flat batch (not a multiple of the 512-row tile): exercises the
    # cdiv-sized row-tiled grid path with a masked final block.
    vad_big = jax.random.uniform(k_x2, (1000, input_dim), dtype=jnp.float32,
                                 minval=-1.0, maxval=1.0)
    out_big = jax.block_until_ready(vad_projection_forward(vad_big, W_T))
    ref_big = vad_big @ W.T
    assert out_big.shape == (1000, output_dim)
    assert jnp.allclose(out_big, ref_big, atol=1e-5, rtol=1e-5)

    print("KERNEL_OK")
</pallas_src>

<mosaic_0001>
module attributes {stable_mosaic.version = 11 : i64} {
  func.func @_vad_proj_kernel(%arg0: memref<8x3xf32, #tpu.memory_space<vmem>>, %arg1: memref<3x768xf32, #tpu.memory_space<vmem>>, %arg2: memref<8x768xf32, #tpu.memory_space<vmem>>) attributes {dimension_semantics = [], scalar_prefetch = 0 : i64, scratch_operands = 0 : i64, tpu.core_type = #tpu.core_type<tc>} {
    %c0 = arith.constant 0 : index
    %c0_0 = arith.constant 0 : index
    %0 = vector.load %arg0[%c0, %c0_0] : memref<8x3xf32, #tpu.memory_space<vmem>>, vector<8x3xf32>
    %c0_1 = arith.constant 0 : index
    %c0_2 = arith.constant 0 : index
    %1 = vector.load %arg1[%c0_1, %c0_2] : memref<3x768xf32, #tpu.memory_space<vmem>>, vector<3x768xf32>
    %2 = vector.extract_strided_slice %0 {offsets = [0, 0], sizes = [8, 1], strides = [1, 1]} : vector<8x3xf32> to vector<8x1xf32>
    %3 = vector.extract_strided_slice %1 {offsets = [0, 0], sizes = [1, 768], strides = [1, 1]} : vector<3x768xf32> to vector<1x768xf32>
    %4 = vector.broadcast %2 : vector<8x1xf32> to vector<8x768xf32>
    %5 = vector.broadcast %3 : vector<1x768xf32> to vector<8x768xf32>
    %6 = arith.mulf %4, %5 : vector<8x768xf32>
    %7 = vector.extract_strided_slice %0 {offsets = [0, 1], sizes = [8, 1], strides = [1, 1]} : vector<8x3xf32> to vector<8x1xf32>
    %8 = vector.extract_strided_slice %1 {offsets = [1, 0], sizes = [1, 768], strides = [1, 1]} : vector<3x768xf32> to vector<1x768xf32>
    %9 = vector.broadcast %7 : vector<8x1xf32> to vector<8x768xf32>
    %10 = vector.broadcast %8 : vector<1x768xf32> to vector<8x768xf32>
    %11 = arith.mulf %9, %10 : vector<8x768xf32>
    %12 = arith.addf %6, %11 : vector<8x768xf32>
    %13 = vector.extract_strided_slice %0 {offsets = [0, 2], sizes = [8, 1], strides = [1, 1]} : vector<8x3xf32> to vector<8x1xf32>
    %14 = vector.extract_strided_slice %1 {offsets = [2, 0], sizes = [1, 768], strides = [1, 1]} : vector<3x768xf32> to vector<1x768xf32>
    %15 = vector.broadcast %13 : vector<8x1xf32> to vector<8x768xf32>
    %16 = vector.broadcast %14 : vector<1x768xf32> to vector<8x768xf32>
    %17 = arith.mulf %15, %16 : vector<8x768xf32>
    %18 = arith.addf %12, %17 : vector<8x768xf32>
    %c0_3 = arith.constant 0 : index
    %c0_4 = arith.constant 0 : index
    %19 = vector.load %arg2[%c0_3, %c0_4] : memref<8x768xf32, #tpu.memory_space<vmem>>, vector<8x768xf32>
    tpu.vector_store %arg2[%c0_3, %c0_4], %18 {strides = array<i32>} : memref<8x768xf32, #tpu.memory_space<vmem>>, vector<8x768xf32>,
    return
  }
}

</mosaic_0001>

<llo_original>
// kernel: tpu_custom_call.1
$region0: #{tpu_custom_call.1}
  #allocation0 [shape = 'u32[]', space=smem, size = 0x4, offset = 0x4, fixed_abs, tag = 'smem constant byte address 0x4 - core index']
  #allocation1 [shape = 'u32[144,128]{1,0:T(1,128)}', space=vmem, size = 0x12000, scoped, tag = 'internal scratch']
  %s0 = inlined_call_operand.vmem [shape: f32[8,3], index: 0, kind: input, shape index: {}]
  %s1 = inlined_call_operand.hbm [shape: f32[3,768], index: 1, kind: input, shape index: {}]
  %s2 = inlined_call_operand.hbm [shape: f32[8,768], index: 2, kind: output, shape index: {}]
  %s3 = sld [smem:[#allocation0]]
  $region22: #{tpu_custom_call.1} parent=0
    _
  %s5 = ssub.s32 1, %s3
  %s6 = scalar_select 0, %s5, %s3
  $region1: #{tpu_custom_call.1} parent=0
    #allocation2 [shape = 'u8[12288]{0}', space=vmem, size = 0x3000, scoped, tag = 'input window, operand 1, single buffered']
    #allocation3 [shape = 's32[1]{0}', space=sflag, size = 0x4, scoped, tag = 'scoped memory for tpu_custom_call.1']
    #allocation4 [shape = 's32[1]{0}', space=sflag, size = 0x4, scoped, tag = 'scoped memory for tpu_custom_call.1']
    #allocation5 [shape = 'u8[24576]{0}', space=vmem, size = 0x6000, scoped, tag = 'output window, operand 0, single buffered']
    %7 = vsyncpa [#allocation3], 0
    %8 = vsyncpa [#allocation4], 0
    // Predicated region
    $region2: #{tpu_custom_call.1} parent=1 // pred_check
      _
    $region3: #{tpu_custom_call.1} parent=1 // pred_check_branch
      %10 = sbr.rel (0) target = $region5
    $region4: #{tpu_custom_call.1} parent=1 // pred_region
      _
    $region5: #{tpu_custom_call.1} parent=1 // pred_fallthru
      _
    // Predicated region
    $region6: #{tpu_custom_call.1} parent=1 // pred_check
      _
    $region7: #{tpu_custom_call.1} parent=1 // pred_check_branch
      %12 = sbr.rel (0) target = $region9
    $region8: #{tpu_custom_call.1} parent=1 // pred_region
      %s14 = ssub.s32 384, 384
      %15 = vsyncadd [#allocation3], %s14
      %s17 = sshll.u32 [#allocation2], 4
      %s18 = int_to_ptr.vmem [resolvable:$true] %s17
      %20 = dma.hbm_to_vmem [thread:$0]  %s1, 384, %s18, [#allocation3]
    $region9: #{tpu_custom_call.1} parent=1 // pred_fallthru
      _
    // Predicated region
    $region10: #{tpu_custom_call.1} parent=1 // pred_check
      _
    $region11: #{tpu_custom_call.1} parent=1 // pred_check_branch
      %22 = sbr.rel (0) target = $region13
    $region12: #{tpu_custom_call.1} parent=1 // pred_region
      %23 = dma.done [#allocation3], 384
    $region13: #{tpu_custom_call.1} parent=1 // pred_fallthru
      _
    %v24 = vld [vmem:[%s0] sm:$0xff]
    %v25 = vld [vmem:[#allocation2] sm:$0x77]
    %v26 = vld [vmem:[#allocation2 + $0x8] sm:$0x77]
    %v27 = vld [vmem:[#allocation2 + $0x10] sm:$0x77]
    %29 = vset.pattern.permute.xlu0 0
    %30 = vperm.xlu0 %29, %v24
    %v31 = vpop.permute.xlu0 %30
    %v36 = vlaneseq
    %v37 = vshrl.u32 %v36, 7
    %v38 = vsub.s32 0, %v37
    %v39 = vrot.slane %v25, %v38
    %v40 = vlaneseq
    %v41 = vshrl.u32 %v40, 7
    %v42 = vsub.s32 4, %v41
    %v43 = vrot.slane %v25, %v42
    %v44 = vlaneseq
    %v45 = vshrl.u32 %v44, 7
    %v46 = vsub.s32 0, %v45
    %v47 = vrot.slane %v26, %v46
    %v48 = vlaneseq
    %v49 = vshrl.u32 %v48, 7
    %v50 = vsub.s32 4, %v49
    %v51 = vrot.slane %v26, %v50
    %v52 = vlaneseq
    %v53 = vshrl.u32 %v52, 7
    %v54 = vsub.s32 0, %v53
    %v55 = vrot.slane %v27, %v54
    %v56 = vlaneseq
    %v57 = vshrl.u32 %v56, 7
    %v58 = vsub.s32 4, %v57
    %v59 = vrot.slane %v27, %v58
    %v66 = vlaneseq
    %v67 = vshrl.u32 %v66, 7
    %v68 = vsub.s32 0, %v67
    %v69 = vrot.slane %v39, %v68
    %v70 = vlaneseq
    %v71 = vshrl.u32 %v70, 7
    %v72 = vsub.s32 0, %v71
    %v73 = vrot.slane %v43, %v72
    %v74 = vlaneseq
    %v75 = vshrl.u32 %v74, 7
    %v76 = vsub.s32 0, %v75
    %v77 = vrot.slane %v47, %v76
    %v78 = vlaneseq
    %v79 = vshrl.u32 %v78, 7
    %v80 = vsub.s32 0, %v79
    %v81 = vrot.slane %v51, %v80
    %v82 = vlaneseq
    %v83 = vshrl.u32 %v82, 7
    %v84 = vsub.s32 0, %v83
    %v85 = vrot.slane %v55, %v84
    %v86 = vlaneseq
    %v87 = vshrl.u32 %v86, 7
    %v88 = vsub.s32 0, %v87
    %v89 = vrot.slane %v59, %v88
    %v90 = vmul.f32 %v31, %v69
    %v91 = vmul.f32 %v31, %v73
    %v92 = vmul.f32 %v31, %v77
    %v93 = vmul.f32 %v31, %v81
    %v94 = vmul.f32 %v31, %v85
    %v95 = vmul.f32 %v31, %v89
    %96 = vset.pattern.permute.xlu0 1
    %97 = vperm.xlu0 %96, %v24
    %v98 = vpop.permute.xlu0 %97
    %v100 = vlaneseq
    %v101 = vshrl.u32 %v100, 7
    %v102 = vsub.s32 1, %v101
    %v103 = vrot.slane %v25, %v102
    %v104 = vlaneseq
    %v105 = vshrl.u32 %v104, 7
    %v106 = vsub.s32 5, %v105
    %v107 = vrot.slane %v25, %v106
    %v108 = vlaneseq
    %v109 = vshrl.u32 %v108, 7
    %v110 = vsub.s32 1, %v109
    %v111 = vrot.slane %v26, %v110
    %v112 = vlaneseq
    %v113 = vshrl.u32 %v112, 7
    %v114 = vsub.s32 5, %v113
    %v115 = vrot.slane %v26, %v114
    %v116 = vlaneseq
    %v117 = vshrl.u32 %v116, 7
    %v118 = vsub.s32 1, %v117
    %v119 = vrot.slane %v27, %v118
    %v120 = vlaneseq
    %v121 = vshrl.u32 %v120, 7
    %v122 = vsub.s32 5, %v121
    %v123 = vrot.slane %v27, %v122
    %v130 = vlaneseq
    %v131 = vshrl.u32 %v130, 7
    %v132 = vsub.s32 1, %v131
    %v133 = vrot.slane %v103, %v132
    %v134 = vlaneseq
    %v135 = vshrl.u32 %v134, 7
    %v136 = vsub.s32 1, %v135
    %v137 = vrot.slane %v107, %v136
    %v138 = vlaneseq
    %v139 = vshrl.u32 %v138, 7
    %v140 = vsub.s32 1, %v139
    %v141 = vrot.slane %v111, %v140
    %v142 = vlaneseq
    %v143 = vshrl.u32 %v142, 7
    %v144 = vsub.s32 1, %v143
    %v145 = vrot.slane %v115, %v144
    %v146 = vlaneseq
    %v147 = vshrl.u32 %v146, 7
    %v148 = vsub.s32 1, %v147
    %v149 = vrot.slane %v119, %v148
    %v150 = vlaneseq
    %v151 = vshrl.u32 %v150, 7
    %v152 = vsub.s32 1, %v151
    %v153 = vrot.slane %v123, %v152
    %v154 = vmul.f32 %v98, %v133
    %v155 = vmul.f32 %v98, %v137
    %v156 = vmul.f32 %v98, %v141
    %v157 = vmul.f32 %v98, %v145
    %v158 = vmul.f32 %v98, %v149
    %v159 = vmul.f32 %v98, %v153
    %v160 = vadd.f32 %v90, %v154
    %v161 = vadd.f32 %v91, %v155
    %v162 = vadd.f32 %v92, %v156
    %v163 = vadd.f32 %v93, %v157
    %v164 = vadd.f32 %v94, %v158
    %v165 = vadd.f32 %v95, %v159
    %166 = vset.pattern.permute.xlu0 2
    %167 = vperm.xlu0 %166, %v24
    %v168 = vpop.permute.xlu0 %167
    %v170 = vlaneseq
    %v171 = vshrl.u32 %v170, 7
    %v172 = vsub.s32 2, %v171
    %v173 = vrot.slane %v25, %v172
    %v174 = vlaneseq
    %v175 = vshrl.u32 %v174, 7
    %v176 = vsub.s32 6, %v175
    %v177 = vrot.slane %v25, %v176
    %v178 = vlaneseq
    %v179 = vshrl.u32 %v178, 7
    %v180 = vsub.s32 2, %v179
    %v181 = vrot.slane %v26, %v180
    %v182 = vlaneseq
    %v183 = vshrl.u32 %v182, 7
    %v184 = vsub.s32 6, %v183
    %v185 = vrot.slane %v26, %v184
    %v186 = vlaneseq
    %v187 = vshrl.u32 %v186, 7
    %v188 = vsub.s32 2, %v187
    %v189 = vrot.slane %v27, %v188
    %v190 = vlaneseq
    %v191 = vshrl.u32 %v190, 7
    %v192 = vsub.s32 6, %v191
    %v193 = vrot.slane %v27, %v192
    %v200 = vlaneseq
    %v201 = vshrl.u32 %v200, 7
    %v202 = vsub.s32 2, %v201
    %v203 = vrot.slane %v173, %v202
    %v204 = vlaneseq
    %v205 = vshrl.u32 %v204, 7
    %v206 = vsub.s32 2, %v205
    %v207 = vrot.slane %v177, %v206
    %v208 = vlaneseq
    %v209 = vshrl.u32 %v208, 7
    %v210 = vsub.s32 2, %v209
    %v211 = vrot.slane %v181, %v210
    %v212 = vlaneseq
    %v213 = vshrl.u32 %v212, 7
    %v214 = vsub.s32 2, %v213
    %v215 = vrot.slane %v185, %v214
    %v216 = vlaneseq
    %v217 = vshrl.u32 %v216, 7
    %v218 = vsub.s32 2, %v217
    %v219 = vrot.slane %v189, %v218
    %v220 = vlaneseq
    %v221 = vshrl.u32 %v220, 7
    %v222 = vsub.s32 2, %v221
    %v223 = vrot.slane %v193, %v222
    %v224 = vmul.f32 %v168, %v203
    %v225 = vmul.f32 %v168, %v207
    %v226 = vmul.f32 %v168, %v211
    %v227 = vmul.f32 %v168, %v215
    %v228 = vmul.f32 %v168, %v219
    %v229 = vmul.f32 %v168, %v223
    %v230 = vadd.f32 %v160, %v224
    %v231 = vadd.f32 %v161, %v225
    %v232 = vadd.f32 %v162, %v226
    %v233 = vadd.f32 %v163, %v227
    %v234 = vadd.f32 %v164, %v228
    %v235 = vadd.f32 %v165, %v229
    %236 = vst [vmem:[#allocation5] sm:$0xff] %v230
    %237 = vst [vmem:[#allocation5 + $0x8] sm:$0xff] %v231
    %238 = vst [vmem:[#allocation5 + $0x10] sm:$0xff] %v232
    %239 = vst [vmem:[#allocation5 + $0x18] sm:$0xff] %v233
    %240 = vst [vmem:[#allocation5 + $0x20] sm:$0xff] %v234
    %241 = vst [vmem:[#allocation5 + $0x28] sm:$0xff] %v235
    // Predicated region
    $region14: #{tpu_custom_call.1} parent=1 // pred_check
      _
    $region15: #{tpu_custom_call.1} parent=1 // pred_check_branch
      %243 = sbr.rel (0) target = $region17
    $region16: #{tpu_custom_call.1} parent=1 // pred_region
      %s245 = ssub.s32 768, 768
      %246 = vsyncadd [#allocation4], %s245
      %s248 = sshll.u32 [#allocation5], 4
      %s249 = int_to_ptr.vmem [resolvable:$true] %s248
      %251 = dma.vmem_to_hbm [thread:$0]  %s249, 768, %s2, [#allocation4]
    $region17: #{tpu_custom_call.1} parent=1 // pred_fallthru
      _
    // Predicated region
    $region18: #{tpu_custom_call.1} parent=1 // pred_check
      _
    $region19: #{tpu_custom_call.1} parent=1 // pred_check_branch
      %253 = sbr.rel (0) target = $region21
    $region20: #{tpu_custom_call.1} parent=1 // pred_region
      %254 = dma.done [#allocation4], 768
    $region21: #{tpu_custom_call.1} parent=1 // pred_fallthru
      _
    %255 = vsyncpa [#allocation3], 1
    %256 = vsyncpa [#allocation4], 1

</llo_original>
